<compile_context>
chip_gen: v5e
topology: v5e:2x2
jax: 0.10.0
libtpu: 0.0.40
codegen_flags: <defaults>
</compile_context>

<pallas_src>
import jax
import jax.numpy as jnp
from jax import lax
from jax.experimental import pallas as pl
from jax.experimental.pallas import tpu as pltpu

SCALING_FACTOR = 1.0


def _make_kernel(H, scale, cast_x_bf16):
    scale_is_one = (scale == 1)

    def kernel(x_ref, w_ref, b_ref, o_ref):
        # x_ref: (TM, H) row tile; w_ref: (H, H) already (in, out); b_ref: (1, H)
        x = x_ref[...]
        x_mm = x.astype(jnp.bfloat16) if cast_x_bf16 else x

        # Canonical K-major contraction: x (TM, K) @ w (K, N) -> no in-kernel
        # weight transpose, f32 accumulation on the MXU.
        y = lax.dot_general(
            x_mm, w_ref[...],
            dimension_numbers=(((1,), (0,)), ((), ())),
            preferred_element_type=jnp.float32,
        ) + b_ref[...]

        if scale_is_one:
            # scale == 1: skip half is a pure pass-through (no VPU multiplies).
            o_ref[:, :H] = x.astype(o_ref.dtype)
        else:
            # scale is folded into weight/bias in the wrapper for the y half;
            # only the skip half needs one multiply.
            o_ref[:, :H] = (x * scale).astype(o_ref.dtype)
        o_ref[:, H:] = y.astype(o_ref.dtype)

    return kernel


def _vmem_budget_bytes():
    """Generation-aware VMEM budget, leaving headroom for Mosaic scratch/semaphores."""
    try:
        cap = getattr(pltpu.get_tpu_info(), "vmem_capacity_bytes", 64 * 1024 * 1024)
    except Exception:
        cap = 64 * 1024 * 1024  # conservative fallback: v7x per-TC VMEM
    # ~75% of physical, never more than 100 MiB (v5e/v6e: 128 MiB, v7x: 64 MiB).
    return int(min(cap * 3 // 4, 100 * 1024 * 1024))


def dense_connection(x, weight, bias, *, use_bf16_matmul=False):
    """x: (B, S, H); weight: (H, H) torch Linear convention (out, in); bias: (H,).

    Set use_bf16_matmul=True on v6e/v7x for f32 activations (native MXU bf16 rate,
    fp32 accumulation kept); expect ~bf16-level tolerance on the Linear half.
    """
    B, S, H = x.shape
    M = B * S
    dtype = x.dtype
    x2d = x.reshape(M, H)

    # Fold the scaling factor into the Linear params once (outside the kernel).
    if SCALING_FACTOR != 1:
        weight = (weight * SCALING_FACTOR).astype(weight.dtype)
        bias = (bias * SCALING_FACTOR).astype(bias.dtype)

    # One-time wrapper-side transpose to (in, out) and (optionally) bf16 cast of
    # the weight; both are grid-invariant so they must not live in the kernel.
    cast_x_bf16 = bool(use_bf16_matmul) and dtype != jnp.bfloat16
    w_kn = weight.T
    if use_bf16_matmul:
        w_kn = w_kn.astype(jnp.bfloat16)
    b2d = bias.reshape(1, H)

    in_item = jnp.dtype(dtype).itemsize
    w_item = jnp.dtype(w_kn.dtype).itemsize
    b_item = jnp.dtype(b2d.dtype).itemsize

    # --- VMEM accounting ---
    per_row = (2 * H * in_item            # x tile (TM, H), double-buffered
               + 2 * 2 * H * in_item      # out tile (TM, 2H), double-buffered
               + 4 * H                    # f32 matmul intermediate (TM, H)
               + (2 * H if cast_x_bf16 else 0))  # bf16 x temporary
    fixed = 2 * H * H * w_item + 2 * H * b_item  # weight + bias (count dbl-buffered)

    budget = _vmem_budget_bytes()

    # Biggest TM (multiple of 8) that fits the budget; start high since per-step
    # overhead (~0.35 us) and small DMAs dominate at small H.
    TM = 2048
    while TM > 8 and TM * per_row + fixed > budget:
        TM //= 2

    # Guarantee >= 2 grid steps when M allows: engages v7x megacore sharding of
    # the "parallel" M axis and keeps the software pipeline non-degenerate.
    if M > 8:
        half = -(-M // 2)                        # cdiv(M, 2)
        TM = min(TM, max(8, -(-half // 8) * 8))  # rounded up to a multiple of 8
    else:
        TM = 8

    grid_m = pl.cdiv(M, TM)  # no padding: Pallas masks the ragged last block
    vmem_needed = TM * per_row + fixed
    vmem_limit = int(min(max(2 * vmem_needed, 32 * 1024 * 1024), budget))

    kernel = _make_kernel(H, SCALING_FACTOR, cast_x_bf16)

    out2d = pl.pallas_call(
        kernel,
        out_shape=jax.ShapeDtypeStruct((M, 2 * H), dtype),
        grid_spec=pltpu.PrefetchScalarGridSpec(
            num_scalar_prefetch=0,
            grid=(grid_m,),
            in_specs=[
                pl.BlockSpec((TM, H), lambda i: (i, 0)),   # row tile of x (pipelined)
                pl.BlockSpec((H, H), lambda i: (0, 0)),    # weight (in,out), VMEM-resident
                pl.BlockSpec((1, H), lambda i: (0, 0)),    # bias, VMEM-resident
            ],
            out_specs=pl.BlockSpec((TM, 2 * H), lambda i: (i, 0)),
        ),
        compiler_params=pltpu.CompilerParams(
            dimension_semantics=("parallel",),
            vmem_limit_bytes=vmem_limit,
        ),
    )(x2d, w_kn, b2d)

    return out2d.reshape(B, S, 2 * H)


if __name__ == "__main__":
    key = jax.random.PRNGKey(0)
    kx, kw, kb = jax.random.split(key, 3)

    B, S, H = 2, 8, 32
    x = jax.random.normal(kx, (B, S, H), dtype=jnp.float32)
    # Deterministic synthetic Linear(H, H) params (torch convention: (out, in)).
    weight = jax.random.normal(kw, (H, H), dtype=jnp.float32) * 0.1
    bias = jax.random.normal(kb, (H,), dtype=jnp.float32) * 0.1

    # Reference in plain JAX.
    ref = SCALING_FACTOR * jnp.concatenate([x, x @ weight.T + bias], axis=-1)

    # f32 MXU path: tight tolerance vs. the fp32 reference.
    out = jax.block_until_ready(dense_connection(x, weight, bias, use_bf16_matmul=False))
    assert out.shape == (B, S, 2 * H)
    assert jnp.allclose(out, ref, atol=1e-5, rtol=1e-5)

    # bf16 MXU path (recommended default on v6e/v7x for f32 activations):
    # skip half is bit-exact, Linear half at bf16-level tolerance.
    out_bf16 = jax.block_until_ready(dense_connection(x, weight, bias, use_bf16_matmul=True))
    assert out_bf16.shape == (B, S, 2 * H)
    assert jnp.array_equal(out_bf16[..., :H], x)
    assert jnp.allclose(out_bf16[..., H:], ref[..., H:], atol=5e-2, rtol=5e-2)

    print("KERNEL_OK")
</pallas_src>

<mosaic_0001>
module attributes {stable_mosaic.version = 11 : i64} {
  func.func @kernel(%arg0: i32, %arg1: memref<8x32xf32, #tpu.memory_space<vmem>>, %arg2: memref<32x32xf32, #tpu.memory_space<vmem>>, %arg3: memref<1x32xf32, #tpu.memory_space<vmem>>, %arg4: memref<8x64xf32, #tpu.memory_space<vmem>>) attributes {dimension_semantics = [#tpu.dimension_semantics<parallel>], iteration_bounds = array<i64: 2>, scalar_prefetch = 0 : i64, scratch_operands = 0 : i64, tpu.core_type = #tpu.core_type<tc>, window_params = [{transform_indices = @transform_0, window_bounds = array<i64: 8, 32>}, {pipeline_mode = #tpu.pipeline_mode<synchronous>, transform_indices = @transform_1, window_bounds = array<i64: 32, 32>}, {pipeline_mode = #tpu.pipeline_mode<synchronous>, transform_indices = @transform_2, window_bounds = array<i64: 1, 32>}, {transform_indices = @transform_3, window_bounds = array<i64: 8, 64>}]} {
    %c0 = arith.constant 0 : index
    %c0_0 = arith.constant 0 : index
    %0 = vector.load %arg1[%c0, %c0_0] : memref<8x32xf32, #tpu.memory_space<vmem>>, vector<8x32xf32>
    %c0_1 = arith.constant 0 : index
    %c0_2 = arith.constant 0 : index
    %1 = vector.load %arg2[%c0_1, %c0_2] : memref<32x32xf32, #tpu.memory_space<vmem>>, vector<32x32xf32>
    %cst = arith.constant dense<0.000000e+00> : vector<8x32xf32>
    %2 = tpu.matmul %0, %1, %cst {dimension_numbers = #tpu.dot_dimension_numbers<[1], [0], [0], [1], [0, 0, 1, 1], [], []>} : vector<8x32xf32>, vector<32x32xf32>, vector<8x32xf32> -> vector<8x32xf32>
    %c0_3 = arith.constant 0 : index
    %c0_4 = arith.constant 0 : index
    %3 = vector.load %arg3[%c0_3, %c0_4] : memref<1x32xf32, #tpu.memory_space<vmem>>, vector<1x32xf32>
    %4 = vector.broadcast %3 : vector<1x32xf32> to vector<8x32xf32>
    %5 = arith.addf %2, %4 : vector<8x32xf32>
    %c0_5 = arith.constant 0 : index
    %c0_6 = arith.constant 0 : index
    %6 = vector.load %arg4[%c0_5, %c0_6] : memref<8x64xf32, #tpu.memory_space<vmem>>, vector<8x32xf32>
    tpu.vector_store %arg4[%c0_5, %c0_6], %0 {strides = array<i32>} : memref<8x64xf32, #tpu.memory_space<vmem>>, vector<8x32xf32>,
    %c0_7 = arith.constant 0 : index
    %c32 = arith.constant 32 : index
    %7 = vector.load %arg4[%c0_7, %c32] : memref<8x64xf32, #tpu.memory_space<vmem>>, vector<8x32xf32>
    tpu.vector_store %arg4[%c0_7, %c32], %5 {strides = array<i32>} : memref<8x64xf32, #tpu.memory_space<vmem>>, vector<8x32xf32>,
    return
  }
  func.func @transform_0(%arg0: i32) -> (i32, i32) {
    %c0_i32 = arith.constant 0 : i32
    %c0_i32_0 = arith.constant 0 : i32
    return %arg0, %c0_i32 : i32, i32
  }
  func.func @transform_1(%arg0: i32) -> (i32, i32) {
    %c0_i32 = arith.constant 0 : i32
    %c0_i32_0 = arith.constant 0 : i32
    %c0_i32_1 = arith.constant 0 : i32
    return %c0_i32, %c0_i32_0 : i32, i32
  }
  func.func @transform_2(%arg0: i32) -> (i32, i32) {
    %c0_i32 = arith.constant 0 : i32
    %c0_i32_0 = arith.constant 0 : i32
    %c0_i32_1 = arith.constant 0 : i32
    return %c0_i32, %c0_i32_0 : i32, i32
  }
  func.func @transform_3(%arg0: i32) -> (i32, i32) {
    %c0_i32 = arith.constant 0 : i32
    %c0_i32_0 = arith.constant 0 : i32
    return %arg0, %c0_i32 : i32, i32
  }
}

</mosaic_0001>

<llo_original>
// kernel: tpu_custom_call.1
$region0: #{tpu_custom_call.1}
  #allocation0 [shape = 'u32[]', space=smem, size = 0x4, offset = 0x4, fixed_abs, tag = 'smem constant byte address 0x4 - core index']
  #allocation1 [shape = 'u32[72,128]{1,0:T(1,128)}', space=vmem, size = 0x9000, scoped, tag = 'internal scratch']
  %s0 = inlined_call_operand.hbm [shape: f32[16,32], index: 0, kind: input, shape index: {}]
  %s1 = inlined_call_operand.hbm [shape: f32[32,32], index: 1, kind: input, shape index: {}]
  %s2 = inlined_call_operand.vmem [shape: f32[1,32], index: 2, kind: input, shape index: {}]
  %s3 = inlined_call_operand.hbm [shape: f32[16,64], index: 3, kind: output, shape index: {}]
  %s4 = sld [smem:[#allocation0]]
  $region53: #{tpu_custom_call.1} parent=0
    _
  %s6 = ssub.s32 1, %s4
  %s7 = scalar_select 0, %s6, %s4
  $region1: #{tpu_custom_call.1} parent=0
    #allocation2 [shape = 'u8[8192]{0}', space=vmem, size = 0x2000, scoped, tag = 'input window, operand 0']
    #allocation3 [shape = 's32[2]{0}', space=sflag, size = 0x8, scoped, tag = 'scoped memory for tpu_custom_call.1']
    #allocation4 [shape = 's32[2]{0}', space=sflag, size = 0x8, scoped, tag = 'scoped memory for tpu_custom_call.1']
    #allocation5 [shape = 'u8[16384]{0}', space=vmem, size = 0x4000, scoped, tag = 'input window, operand 1, single buffered']
    #allocation6 [shape = 's32[1]{0}', space=sflag, size = 0x4, scoped, tag = 'scoped memory for tpu_custom_call.1']
    #allocation7 [shape = 'u8[8192]{0}', space=vmem, size = 0x2000, scoped, tag = 'output window, operand 0']
    %8 = vsyncpa [#allocation3], 0
    %s9 = scalar_lea.sflag [#allocation3], 1
    %10 = vsyncpa %s9, 0
    %11 = vsyncpa [#allocation6], 0
    %12 = vsyncpa [#allocation4], 0
    %s13 = scalar_lea.sflag [#allocation4], 1
    %14 = vsyncpa %s13, 0
    loop: start=0, step=1, limit=4
    $region2: #{tpu_custom_call.1} parent=1 // loop_pre_header
      _
    $region3: #{tpu_custom_call.1} parent=1 // loop_header
      %s16 = sphi 0, %s20
      %p17 = scmp.ge.s32.totalorder %s16, 4
      %s26 = sphi 0, %s28
      %s29 = sphi 0, %s26
      %s30 = sphi 0, %s29
      %s46 = sphi 0, %s30
      %s50 = sphi 0, %s50
      %s52 = sphi 0, %s50
      %s53 = sphi 0, %s52
      %s67 = sphi 0, %s53
      %s71 = sphi 0, %s71
      %s73 = sphi 0, %s71
      %s74 = sphi 0, %s73
      %s88 = sphi 0, %s74
      %s94 = sphi 0, %s96
      %s97 = sphi 0, %s94
      %s98 = sphi 0, %s97
      %s114 = sphi 0, %s98
    $region4: #{tpu_custom_call.1} parent=1 // loop_header_branch
      %19 = sbr.rel (%p17) target = $region8
    $region5: #{tpu_custom_call.1} parent=1 // loop_body
      %s21 = ssub.s32 %s16, 1
      %s22 = ssub.s32 %s16, 2
      %s23 = sadd.s32 %s16, 1
      %s24 = ssub.s32 %s16, %s23
      %p25 = scmp.eq.s32.totalorder %s24, 0
      %s27 = sadd.s32 %s26, 1
      %s28 = scalar_select %p25, %s26, %s27
      %p31 = pneg %p25
      %p32 = scmp.eq.s32.totalorder %s16, 1
      %p33 = por %p31, %p32
      %p34 = scmp.ne.s32.totalorder %s26, %s29
      %p35 = scmp.eq.s32.totalorder %s16, 0
      %p36 = por %p34, %p35
      %p37 = scmp.ne.s32.totalorder %s26, %s29
      %p38 = scmp.eq.s32.totalorder %s21, 1
      %p39 = por %p37, %p38
      %p40 = scmp.ne.s32.totalorder %s29, %s30
      %p41 = scmp.eq.s32.totalorder %s21, 0
      %p42 = por %p40, %p41
      %p43 = scmp.ne.s32.totalorder %s29, %s30
      %p44 = scmp.eq.s32.totalorder %s22, 1
      %p45 = por %p43, %p44
      %p47 = scmp.ne.s32.totalorder %s30, %s46
      %p48 = scmp.eq.s32.totalorder %s22, 0
      %p49 = por %p47, %p48
      %s51 = sadd.s32 %s50, 1
      %p54 = scmp.eq.s32.totalorder %s16, 1
      %p55 = scmp.ne.s32.totalorder %s50, %s52
      %p56 = scmp.eq.s32.totalorder %s16, 0
      %p57 = por %p55, %p56
      %p58 = scmp.ne.s32.totalorder %s50, %s52
      %p59 = scmp.eq.s32.totalorder %s21, 1
      %p60 = por %p58, %p59
      %p61 = scmp.ne.s32.totalorder %s52, %s53
      %p62 = scmp.eq.s32.totalorder %s21, 0
      %p63 = por %p61, %p62
      %p64 = scmp.ne.s32.totalorder %s52, %s53
      %p65 = scmp.eq.s32.totalorder %s22, 1
      %p66 = por %p64, %p65
      %p68 = scmp.ne.s32.totalorder %s53, %s67
      %p69 = scmp.eq.s32.totalorder %s22, 0
      %p70 = por %p68, %p69
      %s72 = sadd.s32 %s71, 1
      %p75 = scmp.eq.s32.totalorder %s16, 1
      %p76 = scmp.ne.s32.totalorder %s71, %s73
      %p77 = scmp.eq.s32.totalorder %s16, 0
      %p78 = por %p76, %p77
      %p79 = scmp.ne.s32.totalorder %s71, %s73
      %p80 = scmp.eq.s32.totalorder %s21, 1
      %p81 = por %p79, %p80
      %p82 = scmp.ne.s32.totalorder %s73, %s74
      %p83 = scmp.eq.s32.totalorder %s21, 0
      %p84 = por %p82, %p83
      %p85 = scmp.ne.s32.totalorder %s73, %s74
      %p86 = scmp.eq.s32.totalorder %s22, 1
      %p87 = por %p85, %p86
      %p89 = scmp.ne.s32.totalorder %s74, %s88
      %p90 = scmp.eq.s32.totalorder %s22, 0
      %p91 = por %p89, %p90
      %s92 = ssub.s32 %s16, %s23
      %p93 = scmp.eq.s32.totalorder %s92, 0
      %s95 = sadd.s32 %s94, 1
      %s96 = scalar_select %p93, %s94, %s95
      %p99 = pneg %p93
      %p100 = scmp.eq.s32.totalorder %s16, 1
      %p101 = por %p99, %p100
      %p102 = scmp.ne.s32.totalorder %s94, %s97
      %p103 = scmp.eq.s32.totalorder %s16, 0
      %p104 = por %p102, %p103
      %p105 = scmp.ne.s32.totalorder %s94, %s97
      %p106 = scmp.eq.s32.totalorder %s21, 1
      %p107 = por %p105, %p106
      %p108 = scmp.ne.s32.totalorder %s97, %s98
      %p109 = scmp.eq.s32.totalorder %s21, 0
      %p110 = por %p108, %p109
      %p111 = scmp.ne.s32.totalorder %s97, %s98
      %p112 = scmp.eq.s32.totalorder %s22, 1
      %p113 = por %p111, %p112
      %p115 = scmp.ne.s32.totalorder %s98, %s114
      %p116 = scmp.eq.s32.totalorder %s22, 0
      %p117 = por %p115, %p116
      %p118 = scmp.le.s32.totalorder 1, %s16
      %p119 = scmp.lt.s32.totalorder %s16, 3
      %p120 = pnand %p118, %p119
      %p121 = pneg %p120
      // Predicated region
      $region9: #{tpu_custom_call.1} parent=5 // pred_check
        _
      $region10: #{tpu_custom_call.1} parent=5 // pred_check_branch
        %123 = sbr.rel (%p120) target = $region12
      $region11: #{tpu_custom_call.1} parent=5 // pred_region
        %s124 = ssub.s32 %s16, 1
        // Predicated region
        $region13: #{tpu_custom_call.1} parent=11 // pred_check
          %p125 = pneg %p63
        $region14: #{tpu_custom_call.1} parent=11 // pred_check_branch
          %127 = sbr.rel (%p125) target = $region16
        $region15: #{tpu_custom_call.1} parent=11 // pred_region
          %129 = vsyncadd [#allocation6], 0
          %s130 = sshll.u32 %s1, 4
          %s131 = int_to_ptr.hbm [resolvable:$true] %s130
          %s132 = sshll.u32 [#allocation5], 4
          %s133 = int_to_ptr.vmem [resolvable:$true] %s132
          %138 = dma.hbm_to_vmem [thread:$0]  %s131, 512, %s133, [#allocation6], 128, 128, 8
        $region16: #{tpu_custom_call.1} parent=11 // pred_fallthru
          _
        // Predicated region
        $region17: #{tpu_custom_call.1} parent=11 // pred_check
          %p139 = pneg %p84
        $region18: #{tpu_custom_call.1} parent=11 // pred_check_branch
          %141 = sbr.rel (%p139) target = $region20
        $region19: #{tpu_custom_call.1} parent=11 // pred_region
          _
        $region20: #{tpu_custom_call.1} parent=11 // pred_fallthru
          _
      $region12: #{tpu_custom_call.1} parent=5 // pred_fallthru
        _
      %p142 = scmp.lt.s32.totalorder %s16, 2
      // Predicated region
      $region21: #{tpu_custom_call.1} parent=5 // pred_check
        %p143 = pneg %p142
      $region22: #{tpu_custom_call.1} parent=5 // pred_check_branch
        %145 = sbr.rel (%p143) target = $region24
      $region23: #{tpu_custom_call.1} parent=5 // pred_region
        // Predicated region
        $region25: #{tpu_custom_call.1} parent=23 // pred_check
          %p146 = pneg %p36
        $region26: #{tpu_custom_call.1} parent=23 // pred_check_branch
          %148 = sbr.rel (%p146) target = $region28
        $region27: #{tpu_custom_call.1} parent=23 // pred_region
          %s149 = sand.u32 %s26, 1
          %s150 = scalar_lea.sflag [#allocation3], %s149
          %s151 = sand.u32 %s26, 1
          %s152 = smul.addr %s151, 8
          %s153 = scalar_lea.vmem [#allocation2], %s152
          %155 = vsyncadd %s150, 0
          %s156 = smul.addr %s16, 8
          %s157 = scalar_lea.hbm %s0, %s156
          %s159 = sshll.u32 %s157, 4
          %s160 = int_to_ptr.hbm [resolvable:$true] %s159
          %s161 = sshll.u32 %s153, 4
          %s162 = int_to_ptr.vmem [resolvable:$true] %s161
          %164 = dma.hbm_to_vmem [thread:$0]  %s160, 128, %s162, %s150
        $region28: #{tpu_custom_call.1} parent=23 // pred_fallthru
          _
      $region24: #{tpu_custom_call.1} parent=5 // pred_fallthru
        _
      %p165 = scmp.le.s32.totalorder 1, %s16
      %p166 = scmp.lt.s32.totalorder %s16, 3
      %p167 = pnand %p165, %p166
      %p168 = pneg %p167
      // Predicated region
      $region29: #{tpu_custom_call.1} parent=5 // pred_check
        _
      $region30: #{tpu_custom_call.1} parent=5 // pred_check_branch
        %170 = sbr.rel (%p167) target = $region32
      $region31: #{tpu_custom_call.1} parent=5 // pred_region
        %s171 = ssub.s32 %s16, 1
        %s172 = sand.u32 %s29, 1
        %s173 = scalar_lea.sflag [#allocation3], %s172
        %s174 = sand.u32 %s29, 1
        %s175 = smul.addr %s174, 8
        %s176 = scalar_lea.vmem [#allocation2], %s175
        // Predicated region
        $region33: #{tpu_custom_call.1} parent=31 // pred_check
          %p177 = pneg %p42
        $region34: #{tpu_custom_call.1} parent=31 // pred_check_branch
          %179 = sbr.rel (%p177) target = $region36
        $region35: #{tpu_custom_call.1} parent=31 // pred_region
          %181 = dma.done %s173, 128
        $region36: #{tpu_custom_call.1} parent=31 // pred_fallthru
          _
        // Predicated region
        $region37: #{tpu_custom_call.1} parent=31 // pred_check
          %p182 = pneg %p63
        $region38: #{tpu_custom_call.1} parent=31 // pred_check_branch
          %184 = sbr.rel (%p182) target = $region40
        $region39: #{tpu_custom_call.1} parent=31 // pred_region
          %186 = dma.done [#allocation6], 512
        $region40: #{tpu_custom_call.1} parent=31 // pred_fallthru
          _
        %s187 = sand.u32 %s29, 1
        %s188 = scalar_lea.sflag [#allocation3], %s187
        %s189 = sand.u32 %s29, 1
        %s190 = smul.addr %s189, 8
        %s191 = scalar_lea.vmem [#allocation2], %s190
        %p192 = pneg %p42
        %p193 = pneg %p39
        %p194 = pneg %p63
        %p195 = pneg %p60
        %p196 = pneg %p84
        %p197 = pneg %p81
        %p198 = pneg %p110
        %p199 = pneg %p107
        %s200 = sand.u32 %s97, 1
        %s201 = scalar_lea.sflag [#allocation4], %s200
        %s202 = sand.u32 %s97, 1
        %s203 = smul.addr %s202, 8
        %s204 = scalar_lea.vmem [#allocation7], %s203
        %v205 = vld [vmem:[%s176] sm:$0xff]
        %v206 = vld [vmem:[#allocation5] sm:$0xff]
        %v207 = vld [vmem:[#allocation5 + $0x8] sm:$0xff]
        %v208 = vld [vmem:[#allocation5 + $0x10] sm:$0xff]
        %v209 = vld [vmem:[#allocation5 + $0x18] sm:$0xff]
        %v210 = vld [vmem:[%s2] sm:$0x1]
        %v212 = vperm.slane %v210, 0
        %vm214 = vcmask 261120
        %v216 = vsel %vm214, %v205, 0
        %218 = vmatpush.msra.mxu0 0.0
        %219 = vmatpush.msra.mxu0 0.0
        %220 = vmatpush.msra.mxu0 0.0
        %221 = vmatpush.msra.mxu0 0.0
        %222 = vmatpush.msra.mxu0 0.0
        %223 = vmatpush.msra.mxu0 0.0
        %224 = vmatpush.msra.mxu0 0.0
        %225 = vmatpush.msra.mxu0 0.0
        %226 = vmatpush.msra.mxu0 0.0
        %227 = vmatpush.msra.mxu0 0.0
        %228 = vmatpush.msra.mxu0 0.0
        %229 = vmatpush.msra.mxu0 0.0
        %230 = vmatpush.msra.mxu0 %v209
        %231 = vmatpush.msra.mxu0 %v208
        %232 = vmatpush.msra.mxu0 %v207
        %233 = vmatpush.msra.mxu0 %v206
        %234 = vmatmul.f32.gmra.mxu0 %v216
        %v235 = vpop.f32.mrf.mxu0
        %v236 = vadd.f32 %v212, %v235
        %237 = vdwg.mxu0
        %238 = vst.msk [vmem:[%s204] sm:$0xff] %vm214, %v205
        %240 = vrot.lane.b32.xlu0 %v236, 32
        %v241 = vpop.permute.xlu0 %240
        %vm243 = vcmask 523520
        %244 = vst.msk [vmem:[%s204] sm:$0xff] %vm243, %v241
        %s245 = sand.u32 %s97, 1
        %s246 = scalar_lea.sflag [#allocation4], %s245
        %s247 = sand.u32 %s97, 1
        %s248 = smul.addr %s247, 8
        %s249 = scalar_lea.vmem [#allocation7], %s248
        // Predicated region
        $region41: #{tpu_custom_call.1} parent=31 // pred_check
          %p250 = pneg %p107
        $region42: #{tpu_custom_call.1} parent=31 // pred_check_branch
          %252 = sbr.rel (%p250) target = $region44
        $region43: #{tpu_custom_call.1} parent=31 // pred_region
          %254 = vsyncadd %s246, 0
          %s255 = smul.addr %s21, 8
          %s256 = scalar_lea.hbm %s3, %s255
          %s258 = sshll.u32 %s249, 4
          %s259 = int_to_ptr.vmem [resolvable:$true] %s258
          %s260 = sshll.u32 %s256, 4
          %s261 = int_to_ptr.hbm [resolvable:$true] %s260
          %263 = dma.vmem_to_hbm [thread:$0]  %s259, 128, %s261, %s246
        $region44: #{tpu_custom_call.1} parent=31 // pred_fallthru
          _
      $region32: #{tpu_custom_call.1} parent=5 // pred_fallthru
        _
      %p264 = scmp.le.s32.totalorder 2, %s16
      // Predicated region
      $region45: #{tpu_custom_call.1} parent=5 // pred_check
        %p265 = pneg %p264
      $region46: #{tpu_custom_call.1} parent=5 // pred_check_branch
        %267 = sbr.rel (%p265) target = $region48
      $region47: #{tpu_custom_call.1} parent=5 // pred_region
        %s268 = ssub.s32 %s16, 2
        // Predicated region
        $region49: #{tpu_custom_call.1} parent=47 // pred_check
          %p269 = pneg %p113
        $region50: #{tpu_custom_call.1} parent=47 // pred_check_branch
          %271 = sbr.rel (%p269) target = $region52
        $region51: #{tpu_custom_call.1} parent=47 // pred_region
          %s272 = sand.u32 %s98, 1
          %s273 = scalar_lea.sflag [#allocation4], %s272
          %s274 = sand.u32 %s98, 1
          %s275 = smul.addr %s274, 8
          %s276 = scalar_lea.vmem [#allocation7], %s275
          %278 = dma.done %s273, 128
        $region52: #{tpu_custom_call.1} parent=47 // pred_fallthru
          _
      $region48: #{tpu_custom_call.1} parent=5 // pred_fallthru
        _
    $region6: #{tpu_custom_call.1} parent=1 // loop_footer
      %s20 = sadd.s32 1, %s16
    $region7: #{tpu_custom_call.1} parent=1 // loop_footer_branch
      %15 = sbr.rel target = $region3
    $region8: #{tpu_custom_call.1} parent=1 // loop_exit
      _
    %279 = vsyncpa [#allocation3], 1
    %s280 = scalar_lea.sflag [#allocation3], 1
    %281 = vsyncpa %s280, 1
    %282 = vsyncpa [#allocation6], 1
    %283 = vsyncpa [#allocation4], 1
    %s284 = scalar_lea.sflag [#allocation4], 1
    %285 = vsyncpa %s284, 1

</llo_original>
